<compile_context>
chip_gen: v6e
topology: v6e:2x2x1
jax: 0.10.0
libtpu: 0.0.40
codegen_flags: <defaults>
</compile_context>

<pallas_src>
import functools

import jax
import jax.numpy as jnp
from jax import lax
from jax.experimental import pallas as pl
from jax.experimental.pallas import tpu as pltpu

_VMEM = pl.BlockSpec(memory_space=pltpu.MemorySpace.VMEM)
_NEG = -1e30        # plain Python float literal (never a captured jnp constant)
_LANE = 128
_SUBLANE = 8


def _round_up(v, m):
    return ((v + m - 1) // m) * m


# --------------------------- fused Pallas kernel -----------------------------

def _sage_layer_body(x, mask3, has_nbr, wp, bp, wlr, bl):
    """One SAGEConv(project=True, aggr='max') layer + GraphModel relu.

    x:       (Np, Din_p)     node features (lane-padded)
    mask3:   (Np, Np, 1)     bool, mask3[t, s] = True iff edge s -> t
    has_nbr: (Np, 1)         bool, target t has at least one incoming edge
    wp:  (Din_p, Din_p), bp: (1, Din_p)      projection linear
    wlr: (2*Din_p, Dout_p) == [Wl ; Wr]      fused lin_l / lin_r weights
    bl:  (1, Dout_p)                         lin_l bias
    """
    # h = relu(x @ Wp + bp)   (MXU + VPU)
    h = jnp.dot(x, wp, preferred_element_type=jnp.float32) + bp
    h = jnp.maximum(h, 0.0)

    # agg[t] = max over incoming edges (s -> t) of h[s]; 0 if no neighbors.
    # Dense masked max over the source axis: at this toy size (Np, Np, D) is a
    # handful of vregs, the axis-1 reduce goes to the XLU.
    # TODO(synk): for large graphs tile the source axis (grid + VMEM running-max
    # accumulator) or use an edge-list gather via scalar prefetch.
    masked = jnp.where(mask3, h[None, :, :], _NEG)
    agg = jnp.max(masked, axis=1)
    agg = jnp.where(has_nbr, agg, 0.0)

    # out = relu([agg, x] @ [Wl ; Wr] + bl)   (single wide-K MXU pass)
    cat = jnp.concatenate([agg, x], axis=-1)
    out = jnp.dot(cat, wlr, preferred_element_type=jnp.float32) + bl
    return jnp.maximum(out, 0.0)


def _graph_model_kernel(x_ref, adj_ref,
                        wp1_ref, bp1_ref, wlr1_ref, bl1_ref,
                        wp2_ref, bp2_ref, wlr2_ref, bl2_ref,
                        o_ref):
    # Graph-only quantities computed once and shared by both layers.
    adj = adj_ref[...]
    mask3 = adj[:, :, None] > 0.0
    has_nbr = jnp.sum(adj, axis=1, keepdims=True) > 0.0

    # Both layers fused: h / agg / layer-1 output stay in VMEM (never hit HBM).
    x1 = _sage_layer_body(x_ref[...], mask3, has_nbr,
                          wp1_ref[...], bp1_ref[...], wlr1_ref[...], bl1_ref[...])
    x2 = _sage_layer_body(x1, mask3, has_nbr,
                          wp2_ref[...], bp2_ref[...], wlr2_ref[...], bl2_ref[...])
    o_ref[...] = x2


# ----------------------- host-side (one-time) preprocessing ------------------

def _pad2d(a, rows, cols):
    return jnp.zeros((rows, cols), a.dtype).at[: a.shape[0], : a.shape[1]].set(a)


def pad_layer_params(layer, din, dout):
    """(wp, bp, wl, bl, wr) -> lane-padded (wp, bp, wlr, bl), Wl/Wr fused."""
    wp, bp, wl, bl, wr = layer
    dp, do = _round_up(din, _LANE), _round_up(dout, _LANE)
    wp_p = _pad2d(wp, dp, dp)
    bp_p = _pad2d(bp, 1, dp)
    wlr = jnp.concatenate([_pad2d(wl, dp, do), _pad2d(wr, dp, do)], axis=0)
    bl_p = _pad2d(bl, 1, do)
    return wp_p, bp_p, wlr, bl_p


def build_adjacency(edge_index, num_nodes):
    """Dense (Np, Np) 0/1 mask, adj[t, s] = 1 iff edge s -> t. Built once per graph."""
    n_pad = _round_up(num_nodes, _SUBLANE)
    src, dst = edge_index[0], edge_index[1]
    return jnp.zeros((n_pad, n_pad), jnp.float32).at[dst, src].set(1.0)


# -------------------------------- forward ------------------------------------

@functools.partial(jax.jit, static_argnames=("input_dim", "emb_dim"))
def graph_model(x, adj, padded_params, *, input_dim, emb_dim):
    n = x.shape[0]
    n_pad = adj.shape[0]
    din_p = _round_up(input_dim, _LANE)
    demb_p = padded_params["gcn2"][2].shape[1]       # padded emb dim (lane-dense)

    x_p = _pad2d(x, n_pad, din_p)

    out_p = pl.pallas_call(
        _graph_model_kernel,
        out_shape=jax.ShapeDtypeStruct((n_pad, demb_p), jnp.float32),
        in_specs=[_VMEM] * 10,
        out_specs=_VMEM,
    )(x_p, adj, *padded_params["gcn1"], *padded_params["gcn2"])
    # TODO(synk): for large N add a target-node grid axis ("parallel", for
    # megacore) and a source-block grid axis ("arbitrary") with a VMEM
    # running-max accumulator instead of the single-block dense masked max.
    return out_p[:n, :emb_dim]


# ------------------------- pure-JAX reference ---------------------------------

def _hdot(a, b):
    return jnp.dot(a, b, precision=lax.Precision.HIGHEST)


def _ref_sage_layer(x, adj, wp, bp, wl, bl, wr):
    h = jax.nn.relu(_hdot(x, wp) + bp)
    masked = jnp.where(adj[:, :, None] > 0.0, h[None, :, :], _NEG)
    agg = masked.max(axis=1)
    deg = adj.sum(axis=1, keepdims=True)
    agg = jnp.where(deg > 0.0, agg, 0.0)
    return jax.nn.relu(_hdot(agg, wl) + bl + _hdot(x, wr))


def _ref_model(x, edge_index, params):
    n = x.shape[0]
    src, dst = edge_index[0], edge_index[1]
    adj = jnp.zeros((n, n), jnp.float32).at[dst, src].set(1.0)
    x = _ref_sage_layer(x, adj, *params["gcn1"])
    x = _ref_sage_layer(x, adj, *params["gcn2"])
    return x


# ------------------------------ setup -----------------------------------------

def _init_layer(key, din, dout):
    k = jax.random.split(key, 5)
    wp = 0.2 * jax.random.normal(k[0], (din, din), jnp.float32)   # project lin
    bp = 0.2 * jax.random.normal(k[1], (1, din), jnp.float32)
    wl = 0.2 * jax.random.normal(k[2], (din, dout), jnp.float32)  # lin_l (bias=True)
    bl = 0.2 * jax.random.normal(k[3], (1, dout), jnp.float32)
    wr = 0.2 * jax.random.normal(k[4], (din, dout), jnp.float32)  # lin_r (bias=False)
    return (wp, bp, wl, bl, wr)


if __name__ == "__main__":
    N, INPUT_DIM, HIDDEN_DIM, EMB_DIM = 8, 16, 32, 32

    key = jax.random.PRNGKey(0)
    kx, k1, k2 = jax.random.split(key, 3)

    x = jax.random.normal(kx, (N, INPUT_DIM), jnp.float32)

    # deterministic edge set: ring + skip-3 connections  -> (2, 16)
    idx = jnp.arange(N, dtype=jnp.int32)
    src = jnp.concatenate([idx, idx])
    dst = jnp.concatenate([(idx + 1) % N, (idx + 3) % N])
    edge_index = jnp.stack([src, dst]).astype(jnp.int32)

    params = {
        "gcn1": _init_layer(k1, INPUT_DIM, HIDDEN_DIM),
        "gcn2": _init_layer(k2, HIDDEN_DIM, EMB_DIM),
    }

    # one-time per-graph / per-model preprocessing (out of the hot path)
    adj = build_adjacency(edge_index, N)
    padded_params = {
        "gcn1": pad_layer_params(params["gcn1"], INPUT_DIM, HIDDEN_DIM),
        "gcn2": pad_layer_params(params["gcn2"], HIDDEN_DIM, EMB_DIM),
    }

    out = jax.block_until_ready(
        graph_model(x, adj, padded_params, input_dim=INPUT_DIM, emb_dim=EMB_DIM))
    ref = jax.block_until_ready(_ref_model(x, edge_index, params))

    assert out.shape == (N, EMB_DIM), out.shape
    assert jnp.allclose(out, ref, rtol=2e-3, atol=2e-3), "mismatch vs reference"
    print("KERNEL_OK")
</pallas_src>

<mosaic_0001>
module attributes {stable_mosaic.version = 11 : i64} {
  func.func @_graph_model_kernel(%arg0: memref<8x128xf32, #tpu.memory_space<vmem>>, %arg1: memref<8x8xf32, #tpu.memory_space<vmem>>, %arg2: memref<128x128xf32, #tpu.memory_space<vmem>>, %arg3: memref<1x128xf32, #tpu.memory_space<vmem>>, %arg4: memref<256x128xf32, #tpu.memory_space<vmem>>, %arg5: memref<1x128xf32, #tpu.memory_space<vmem>>, %arg6: memref<128x128xf32, #tpu.memory_space<vmem>>, %arg7: memref<1x128xf32, #tpu.memory_space<vmem>>, %arg8: memref<256x128xf32, #tpu.memory_space<vmem>>, %arg9: memref<1x128xf32, #tpu.memory_space<vmem>>, %arg10: memref<8x128xf32, #tpu.memory_space<vmem>>) attributes {dimension_semantics = [], scalar_prefetch = 0 : i64, scratch_operands = 0 : i64, tpu.core_type = #tpu.core_type<tc>} {
    %c0 = arith.constant 0 : index
    %c0_0 = arith.constant 0 : index
    %0 = vector.load %arg1[%c0, %c0_0] : memref<8x8xf32, #tpu.memory_space<vmem>>, vector<8x8xf32>
    %1 = vector.shape_cast %0 : vector<8x8xf32> to vector<8x8x1xf32>
    %cst = arith.constant 0.000000e+00 : f32
    %2 = vector.broadcast %cst : f32 to vector<8x8x1xf32>
    %3 = arith.cmpf ogt, %1, %2 : vector<8x8x1xf32>
    %cst_1 = arith.constant dense<0.000000e+00> : vector<8xf32>
    %4 = vector.multi_reduction <add>, %0, %cst_1 [1] : vector<8x8xf32> to vector<8xf32>
    %5 = vector.shape_cast %4 : vector<8xf32> to vector<8x1xf32>
    %cst_2 = arith.constant 0.000000e+00 : f32
    %6 = vector.broadcast %cst_2 : f32 to vector<8x1xf32>
    %7 = arith.cmpf ogt, %5, %6 : vector<8x1xf32>
    %c0_3 = arith.constant 0 : index
    %c0_4 = arith.constant 0 : index
    %8 = vector.load %arg0[%c0_3, %c0_4] : memref<8x128xf32, #tpu.memory_space<vmem>>, vector<8x128xf32>
    %c0_5 = arith.constant 0 : index
    %c0_6 = arith.constant 0 : index
    %9 = vector.load %arg2[%c0_5, %c0_6] : memref<128x128xf32, #tpu.memory_space<vmem>>, vector<128x128xf32>
    %c0_7 = arith.constant 0 : index
    %c0_8 = arith.constant 0 : index
    %10 = vector.load %arg3[%c0_7, %c0_8] : memref<1x128xf32, #tpu.memory_space<vmem>>, vector<1x128xf32>
    %c0_9 = arith.constant 0 : index
    %c0_10 = arith.constant 0 : index
    %11 = vector.load %arg4[%c0_9, %c0_10] : memref<256x128xf32, #tpu.memory_space<vmem>>, vector<256x128xf32>
    %c0_11 = arith.constant 0 : index
    %c0_12 = arith.constant 0 : index
    %12 = vector.load %arg5[%c0_11, %c0_12] : memref<1x128xf32, #tpu.memory_space<vmem>>, vector<1x128xf32>
    %cst_13 = arith.constant dense<0.000000e+00> : vector<8x128xf32>
    %13 = tpu.matmul %8, %9, %cst_13 {dimension_numbers = #tpu.dot_dimension_numbers<[1], [0], [0], [1], [0, 0, 1, 1], [], []>} : vector<8x128xf32>, vector<128x128xf32>, vector<8x128xf32> -> vector<8x128xf32>
    %14 = vector.broadcast %10 : vector<1x128xf32> to vector<8x128xf32>
    %15 = arith.addf %13, %14 : vector<8x128xf32>
    %cst_14 = arith.constant 0.000000e+00 : f32
    %16 = vector.broadcast %cst_14 : f32 to vector<8x128xf32>
    %17 = arith.maximumf %15, %16 : vector<8x128xf32>
    %18 = vector.shape_cast %17 : vector<8x128xf32> to vector<1x8x128xf32>
    %cst_15 = arith.constant -1.000000e+30 : f32
    %19 = vector.shape_cast %3 : vector<8x8x1xi1> to vector<8x8x1xi1>
    %20 = vector.broadcast %19 : vector<8x8x1xi1> to vector<8x8x128xi1>
    %21 = vector.shape_cast %18 : vector<1x8x128xf32> to vector<1x8x128xf32>
    %22 = vector.broadcast %21 : vector<1x8x128xf32> to vector<8x8x128xf32>
    %23 = vector.broadcast %cst_15 : f32 to vector<8x8x128xf32>
    %24 = arith.select %20, %22, %23 : vector<8x8x128xi1>, vector<8x8x128xf32>
    %cst_16 = arith.constant dense<0xFF800000> : vector<8x128xf32>
    %25 = vector.multi_reduction <maximumf>, %24, %cst_16 [1] : vector<8x8x128xf32> to vector<8x128xf32>
    %cst_17 = arith.constant 0.000000e+00 : f32
    %26 = vector.shape_cast %7 : vector<8x1xi1> to vector<8x1xi1>
    %27 = vector.broadcast %26 : vector<8x1xi1> to vector<8x128xi1>
    %28 = vector.broadcast %cst_17 : f32 to vector<8x128xf32>
    %29 = arith.select %27, %25, %28 : vector<8x128xi1>, vector<8x128xf32>
    %30 = tpu.concatenate %29, %8 in 1 : vector<8x128xf32>, vector<8x128xf32> -> vector<8x256xf32>
    %cst_18 = arith.constant dense<0.000000e+00> : vector<8x128xf32>
    %31 = tpu.matmul %30, %11, %cst_18 {dimension_numbers = #tpu.dot_dimension_numbers<[1], [0], [0], [1], [0, 0, 1, 1], [], []>} : vector<8x256xf32>, vector<256x128xf32>, vector<8x128xf32> -> vector<8x128xf32>
    %32 = vector.broadcast %12 : vector<1x128xf32> to vector<8x128xf32>
    %33 = arith.addf %31, %32 : vector<8x128xf32>
    %cst_19 = arith.constant 0.000000e+00 : f32
    %34 = vector.broadcast %cst_19 : f32 to vector<8x128xf32>
    %35 = arith.maximumf %33, %34 : vector<8x128xf32>
    %c0_20 = arith.constant 0 : index
    %c0_21 = arith.constant 0 : index
    %36 = vector.load %arg6[%c0_20, %c0_21] : memref<128x128xf32, #tpu.memory_space<vmem>>, vector<128x128xf32>
    %c0_22 = arith.constant 0 : index
    %c0_23 = arith.constant 0 : index
    %37 = vector.load %arg7[%c0_22, %c0_23] : memref<1x128xf32, #tpu.memory_space<vmem>>, vector<1x128xf32>
    %c0_24 = arith.constant 0 : index
    %c0_25 = arith.constant 0 : index
    %38 = vector.load %arg8[%c0_24, %c0_25] : memref<256x128xf32, #tpu.memory_space<vmem>>, vector<256x128xf32>
    %c0_26 = arith.constant 0 : index
    %c0_27 = arith.constant 0 : index
    %39 = vector.load %arg9[%c0_26, %c0_27] : memref<1x128xf32, #tpu.memory_space<vmem>>, vector<1x128xf32>
    %cst_28 = arith.constant dense<0.000000e+00> : vector<8x128xf32>
    %40 = tpu.matmul %35, %36, %cst_28 {dimension_numbers = #tpu.dot_dimension_numbers<[1], [0], [0], [1], [0, 0, 1, 1], [], []>} : vector<8x128xf32>, vector<128x128xf32>, vector<8x128xf32> -> vector<8x128xf32>
    %41 = vector.broadcast %37 : vector<1x128xf32> to vector<8x128xf32>
    %42 = arith.addf %40, %41 : vector<8x128xf32>
    %cst_29 = arith.constant 0.000000e+00 : f32
    %43 = vector.broadcast %cst_29 : f32 to vector<8x128xf32>
    %44 = arith.maximumf %42, %43 : vector<8x128xf32>
    %45 = vector.shape_cast %44 : vector<8x128xf32> to vector<1x8x128xf32>
    %cst_30 = arith.constant -1.000000e+30 : f32
    %46 = vector.shape_cast %3 : vector<8x8x1xi1> to vector<8x8x1xi1>
    %47 = vector.broadcast %46 : vector<8x8x1xi1> to vector<8x8x128xi1>
    %48 = vector.shape_cast %45 : vector<1x8x128xf32> to vector<1x8x128xf32>
    %49 = vector.broadcast %48 : vector<1x8x128xf32> to vector<8x8x128xf32>
    %50 = vector.broadcast %cst_30 : f32 to vector<8x8x128xf32>
    %51 = arith.select %47, %49, %50 : vector<8x8x128xi1>, vector<8x8x128xf32>
    %cst_31 = arith.constant dense<0xFF800000> : vector<8x128xf32>
    %52 = vector.multi_reduction <maximumf>, %51, %cst_31 [1] : vector<8x8x128xf32> to vector<8x128xf32>
    %cst_32 = arith.constant 0.000000e+00 : f32
    %53 = vector.shape_cast %7 : vector<8x1xi1> to vector<8x1xi1>
    %54 = vector.broadcast %53 : vector<8x1xi1> to vector<8x128xi1>
    %55 = vector.broadcast %cst_32 : f32 to vector<8x128xf32>
    %56 = arith.select %54, %52, %55 : vector<8x128xi1>, vector<8x128xf32>
    %57 = tpu.concatenate %56, %35 in 1 : vector<8x128xf32>, vector<8x128xf32> -> vector<8x256xf32>
    %cst_33 = arith.constant dense<0.000000e+00> : vector<8x128xf32>
    %58 = tpu.matmul %57, %38, %cst_33 {dimension_numbers = #tpu.dot_dimension_numbers<[1], [0], [0], [1], [0, 0, 1, 1], [], []>} : vector<8x256xf32>, vector<256x128xf32>, vector<8x128xf32> -> vector<8x128xf32>
    %59 = vector.broadcast %39 : vector<1x128xf32> to vector<8x128xf32>
    %60 = arith.addf %58, %59 : vector<8x128xf32>
    %cst_34 = arith.constant 0.000000e+00 : f32
    %61 = vector.broadcast %cst_34 : f32 to vector<8x128xf32>
    %62 = arith.maximumf %60, %61 : vector<8x128xf32>
    %c0_35 = arith.constant 0 : index
    %c0_36 = arith.constant 0 : index
    %63 = vector.load %arg10[%c0_35, %c0_36] : memref<8x128xf32, #tpu.memory_space<vmem>>, vector<8x128xf32>
    tpu.vector_store %arg10[%c0_35, %c0_36], %62 {strides = array<i32>} : memref<8x128xf32, #tpu.memory_space<vmem>>, vector<8x128xf32>,
    return
  }
}

</mosaic_0001>

<llo_original>
// kernel: graph_model.1
$region0: #{graph_model.1}
  #allocation0 [shape = 'u32[]', space=smem, size = 0x4, offset = 0x4, fixed_abs, tag = 'smem constant byte address 0x4 - core index']
  #allocation1 [shape = 'u32[144,128]{1,0:T(1,128)}', space=vmem, size = 0x12000, scoped, tag = 'internal scratch']
  %s0 = inlined_call_operand.vmem [shape: f32[8,128], index: 0, kind: input, shape index: {}]
  %s1 = inlined_call_operand.vmem [shape: f32[8,8], index: 1, kind: input, shape index: {}]
  %s2 = inlined_call_operand.hbm [shape: f32[128,128], index: 2, kind: input, shape index: {}]
  %s3 = inlined_call_operand.vmem [shape: f32[1,128], index: 3, kind: input, shape index: {}]
  %s4 = inlined_call_operand.hbm [shape: f32[256,128], index: 4, kind: input, shape index: {}]
  %s5 = inlined_call_operand.vmem [shape: f32[1,128], index: 5, kind: input, shape index: {}]
  %s6 = inlined_call_operand.hbm [shape: f32[128,128], index: 6, kind: input, shape index: {}]
  %s7 = inlined_call_operand.vmem [shape: f32[1,128], index: 7, kind: input, shape index: {}]
  %s8 = inlined_call_operand.hbm [shape: f32[256,128], index: 8, kind: input, shape index: {}]
  %s9 = inlined_call_operand.vmem [shape: f32[1,128], index: 9, kind: input, shape index: {}]
  %s10 = inlined_call_operand.hbm [shape: f32[8,128], index: 10, kind: output, shape index: {}]
  %s11 = sld [smem:[#allocation0]]
  $region66: #{graph_model.1} parent=0
    _
  %s13 = ssub.s32 1, %s11
  %s14 = scalar_select 0, %s13, %s11
  $region1: #{graph_model.1} parent=0
    #allocation2 [shape = 'u8[65536]{0}', space=vmem, size = 0x10000, scoped, tag = 'input window, operand 2, single buffered']
    #allocation3 [shape = 's32[1]{0}', space=sflag, size = 0x4, scoped, tag = 'scoped memory for graph_model.1']
    #allocation4 [shape = 's32[1]{0}', space=sflag, size = 0x4, scoped, tag = 'scoped memory for graph_model.1']
    #allocation5 [shape = 'u8[131072]{0}', space=vmem, size = 0x20000, scoped, tag = 'input window, operand 4, single buffered']
    #allocation6 [shape = 's32[1]{0}', space=sflag, size = 0x4, scoped, tag = 'scoped memory for graph_model.1']
    #allocation7 [shape = 'u8[65536]{0}', space=vmem, size = 0x10000, scoped, tag = 'input window, operand 6, single buffered']
    #allocation8 [shape = 'u8[131072]{0}', space=vmem, size = 0x20000, scoped, tag = 'input window, operand 8, single buffered']
    #allocation9 [shape = 's32[1]{0}', space=sflag, size = 0x4, scoped, tag = 'scoped memory for graph_model.1']
    #allocation10 [shape = 'u8[4096]{0}', space=vmem, size = 0x1000, scoped, tag = 'output window, operand 0, single buffered']
    %15 = vsyncpa [#allocation3], 0
    %16 = vsyncpa [#allocation6], 0
    %17 = vsyncpa [#allocation9], 0
    %18 = vsyncpa [#allocation4], 0
    // Predicated region
    $region2: #{graph_model.1} parent=1 // pred_check
      _
    $region3: #{graph_model.1} parent=1 // pred_check_branch
      %20 = sbr.rel (0) target = $region5
    $region4: #{graph_model.1} parent=1 // pred_region
      _
    $region5: #{graph_model.1} parent=1 // pred_fallthru
      _
    // Predicated region
    $region6: #{graph_model.1} parent=1 // pred_check
      _
    $region7: #{graph_model.1} parent=1 // pred_check_branch
      %22 = sbr.rel (0) target = $region9
    $region8: #{graph_model.1} parent=1 // pred_region
      _
    $region9: #{graph_model.1} parent=1 // pred_fallthru
      _
    // Predicated region
    $region10: #{graph_model.1} parent=1 // pred_check
      _
    $region11: #{graph_model.1} parent=1 // pred_check_branch
      %24 = sbr.rel (0) target = $region13
    $region12: #{graph_model.1} parent=1 // pred_region
      %s26 = ssub.s32 2048, 2048
      %27 = vsyncadd [#allocation3], %s26
      %s28 = sshll.u32 [#allocation2], 4
      %s29 = int_to_ptr.vmem [resolvable:$true] %s28
      %34 = dma.hbm_to_vmem [thread:$0]  %s2, 2048, %s29, [#allocation3], 128, 128, 8
    $region13: #{graph_model.1} parent=1 // pred_fallthru
      _
    // Predicated region
    $region14: #{graph_model.1} parent=1 // pred_check
      _
    $region15: #{graph_model.1} parent=1 // pred_check_branch
      %36 = sbr.rel (0) target = $region17
    $region16: #{graph_model.1} parent=1 // pred_region
      _
    $region17: #{graph_model.1} parent=1 // pred_fallthru
      _
    // Predicated region
    $region18: #{graph_model.1} parent=1 // pred_check
      _
    $region19: #{graph_model.1} parent=1 // pred_check_branch
      %38 = sbr.rel (0) target = $region21
    $region20: #{graph_model.1} parent=1 // pred_region
      %s40 = ssub.s32 4096, 4096
      %41 = vsyncadd [#allocation6], %s40
      %s42 = sshll.u32 [#allocation5], 4
      %s43 = int_to_ptr.vmem [resolvable:$true] %s42
      %48 = dma.hbm_to_vmem [thread:$0]  %s4, 4096, %s43, [#allocation6], 128, 128, 8
    $region21: #{graph_model.1} parent=1 // pred_fallthru
      _
    // Predicated region
    $region22: #{graph_model.1} parent=1 // pred_check
      _
    $region23: #{graph_model.1} parent=1 // pred_check_branch
      %50 = sbr.rel (0) target = $region25
    $region24: #{graph_model.1} parent=1 // pred_region
      _
    $region25: #{graph_model.1} parent=1 // pred_fallthru
      _
    // Predicated region
    $region26: #{graph_model.1} parent=1 // pred_check
      _
    $region27: #{graph_model.1} parent=1 // pred_check_branch
      %52 = sbr.rel (0) target = $region29
    $region28: #{graph_model.1} parent=1 // pred_region
      %s54 = ssub.s32 2048, 2048
      %55 = vsyncadd [#allocation6], %s54
      %s56 = sshll.u32 [#allocation7], 4
      %s57 = int_to_ptr.vmem [resolvable:$true] %s56
      %62 = dma.hbm_to_vmem [thread:$0]  %s6, 2048, %s57, [#allocation6], 128, 128, 8
    $region29: #{graph_model.1} parent=1 // pred_fallthru
      _
    // Predicated region
    $region30: #{graph_model.1} parent=1 // pred_check
      _
    $region31: #{graph_model.1} parent=1 // pred_check_branch
      %64 = sbr.rel (0) target = $region33
    $region32: #{graph_model.1} parent=1 // pred_region
      _
    $region33: #{graph_model.1} parent=1 // pred_fallthru
      _
    // Predicated region
    $region34: #{graph_model.1} parent=1 // pred_check
      _
    $region35: #{graph_model.1} parent=1 // pred_check_branch
      %66 = sbr.rel (0) target = $region37
    $region36: #{graph_model.1} parent=1 // pred_region
      %s68 = ssub.s32 4096, 4096
      %69 = vsyncadd [#allocation9], %s68
      %s70 = sshll.u32 [#allocation8], 4
      %s71 = int_to_ptr.vmem [resolvable:$true] %s70
      %76 = dma.hbm_to_vmem [thread:$0]  %s8, 4096, %s71, [#allocation9], 128, 128, 8
    $region37: #{graph_model.1} parent=1 // pred_fallthru
      _
    // Predicated region
    $region38: #{graph_model.1} parent=1 // pred_check
      _
    $region39: #{graph_model.1} parent=1 // pred_check_branch
      %78 = sbr.rel (0) target = $region41
    $region40: #{graph_model.1} parent=1 // pred_region
      _
    $region41: #{graph_model.1} parent=1 // pred_fallthru
      _
    // Predicated region
    $region42: #{graph_model.1} parent=1 // pred_check
      _
    $region43: #{graph_model.1} parent=1 // pred_check_branch
      %80 = sbr.rel (0) target = $region45
    $region44: #{graph_model.1} parent=1 // pred_region
      %81 = dma.done [#allocation3], 2048
    $region45: #{graph_model.1} parent=1 // pred_fallthru
      _
    // Predicated region
    $region46: #{graph_model.1} parent=1 // pred_check
      _
    $region47: #{graph_model.1} parent=1 // pred_check_branch
      %83 = sbr.rel (0) target = $region49
    $region48: #{graph_model.1} parent=1 // pred_region
      %84 = dma.done [#allocation6], 4096
    $region49: #{graph_model.1} parent=1 // pred_fallthru
      _
    // Predicated region
    $region50: #{graph_model.1} parent=1 // pred_check
      _
    $region51: #{graph_model.1} parent=1 // pred_check_branch
      %86 = sbr.rel (0) target = $region53
    $region52: #{graph_model.1} parent=1 // pred_region
      %87 = dma.done [#allocation6], 2048
    $region53: #{graph_model.1} parent=1 // pred_fallthru
      _
    // Predicated region
    $region54: #{graph_model.1} parent=1 // pred_check
      _
    $region55: #{graph_model.1} parent=1 // pred_check_branch
      %89 = sbr.rel (0) target = $region57
    $region56: #{graph_model.1} parent=1 // pred_region
      %90 = dma.done [#allocation9], 4096
    $region57: #{graph_model.1} parent=1 // pred_fallthru
      _
    %v91 = vld [vmem:[%s1] sm:$0xff]
    %v92 = vlaneseq
    %v93 = vshrl.u32 %v92, 7
    %v94 = vsub.s32 0, %v93
    %v95 = vrot.slane %v91, %v94
    %97 = vbcast.lane.b32.xlu0 %v95, 256
    %v98 = vpop.permute.xlu0 %97
    %v99 = vlaneseq
    %v100 = vshrl.u32 %v99, 7
    %v101 = vsub.s32 1, %v100
    %v102 = vrot.slane %v91, %v101
    %104 = vbcast.lane.b32.xlu0 %v102, 256
    %v105 = vpop.permute.xlu0 %104
    %v106 = vlaneseq
    %v107 = vshrl.u32 %v106, 7
    %v108 = vsub.s32 2, %v107
    %v109 = vrot.slane %v91, %v108
    %111 = vbcast.lane.b32.xlu0 %v109, 256
    %v112 = vpop.permute.xlu0 %111
    %v113 = vlaneseq
    %v114 = vshrl.u32 %v113, 7
    %v115 = vsub.s32 3, %v114
    %v116 = vrot.slane %v91, %v115
    %118 = vbcast.lane.b32.xlu0 %v116, 256
    %v119 = vpop.permute.xlu0 %118
    %v120 = vlaneseq
    %v121 = vshrl.u32 %v120, 7
    %v122 = vsub.s32 4, %v121
    %v123 = vrot.slane %v91, %v122
    %125 = vbcast.lane.b32.xlu0 %v123, 256
    %v126 = vpop.permute.xlu0 %125
    %v127 = vlaneseq
    %v128 = vshrl.u32 %v127, 7
    %v129 = vsub.s32 5, %v128
    %v130 = vrot.slane %v91, %v129
    %132 = vbcast.lane.b32.xlu0 %v130, 256
    %v133 = vpop.permute.xlu0 %132
    %v134 = vlaneseq
    %v135 = vshrl.u32 %v134, 7
    %v136 = vsub.s32 6, %v135
    %v137 = vrot.slane %v91, %v136
    %139 = vbcast.lane.b32.xlu0 %v137, 256
    %v140 = vpop.permute.xlu0 %139
    %v141 = vlaneseq
    %v142 = vshrl.u32 %v141, 7
    %v143 = vsub.s32 7, %v142
    %v144 = vrot.slane %v91, %v143
    %146 = vbcast.lane.b32.xlu0 %v144, 256
    %v147 = vpop.permute.xlu0 %146
    %vm148 = vcmp.gt.f32.partialorder %v98, 0.0
    %vm149 = vcmp.gt.f32.partialorder %v105, 0.0
    %vm150 = vcmp.gt.f32.partialorder %v112, 0.0
    %vm151 = vcmp.gt.f32.partialorder %v119, 0.0
    %vm152 = vcmp.gt.f32.partialorder %v126, 0.0
    %vm153 = vcmp.gt.f32.partialorder %v133, 0.0
    %vm154 = vcmp.gt.f32.partialorder %v140, 0.0
    %vm155 = vcmp.gt.f32.partialorder %v147, 0.0
    %vm156 = vcmask 64512
    %v157 = vsel %vm156, %v91, 0.0
    %158 = vadd.xlane.f32.xlu0 %v157
    %v159 = vpop.xlane.xlu0 %158
    %vm160 = vcmp.gt.f32.partialorder %v159, 0.0
    %v161 = vld [vmem:[%s0] sm:$0xff]
    %v162 = vld [vmem:[#allocation2] sm:$0xff]
    %v163 = vld [vmem:[#allocation2 + $0x8] sm:$0xff]
    %v164 = vld [vmem:[#allocation2 + $0x10] sm:$0xff]
    %v165 = vld [vmem:[#allocation2 + $0x18] sm:$0xff]
    %v166 = vld [vmem:[#allocation2 + $0x20] sm:$0xff]
    %v167 = vld [vmem:[#allocation2 + $0x28] sm:$0xff]
    %v168 = vld [vmem:[#allocation2 + $0x30] sm:$0xff]
    %v169 = vld [vmem:[#allocation2 + $0x38] sm:$0xff]
    %v170 = vld [vmem:[#allocation2 + $0x40] sm:$0xff]
    %v171 = vld [vmem:[#allocation2 + $0x48] sm:$0xff]
    %v172 = vld [vmem:[#allocation2 + $0x50] sm:$0xff]
    %v173 = vld [vmem:[#allocation2 + $0x58] sm:$0xff]
    %v174 = vld [vmem:[#allocation2 + $0x60] sm:$0xff]
    %v175 = vld [vmem:[#allocation2 + $0x68] sm:$0xff]
    %v176 = vld [vmem:[#allocation2 + $0x70] sm:$0xff]
    %v177 = vld [vmem:[#allocation2 + $0x78] sm:$0xff]
    %v178 = vld [vmem:[%s3] sm:$0x1]
    %v179 = vld [vmem:[#allocation5] sm:$0xff]
    %v180 = vld [vmem:[#allocation5 + $0x8] sm:$0xff]
    %v181 = vld [vmem:[#allocation5 + $0x10] sm:$0xff]
    %v182 = vld [vmem:[#allocation5 + $0x18] sm:$0xff]
    %v183 = vld [vmem:[#allocation5 + $0x20] sm:$0xff]
    %v184 = vld [vmem:[#allocation5 + $0x28] sm:$0xff]
    %v185 = vld [vmem:[#allocation5 + $0x30] sm:$0xff]
    %v186 = vld [vmem:[#allocation5 + $0x38] sm:$0xff]
    %v187 = vld [vmem:[#allocation5 + $0x40] sm:$0xff]
    %v188 = vld [vmem:[#allocation5 + $0x48] sm:$0xff]
    %v189 = vld [vmem:[#allocation5 + $0x50] sm:$0xff]
    %v190 = vld [vmem:[#allocation5 + $0x58] sm:$0xff]
    %v191 = vld [vmem:[#allocation5 + $0x60] sm:$0xff]
    %v192 = vld [vmem:[#allocation5 + $0x68] sm:$0xff]
    %v193 = vld [vmem:[#allocation5 + $0x70] sm:$0xff]
    %v194 = vld [vmem:[#allocation5 + $0x78] sm:$0xff]
    %v195 = vld [vmem:[#allocation5 + $0x80] sm:$0xff]
    %v196 = vld [vmem:[#allocation5 + $0x88] sm:$0xff]
    %v197 = vld [vmem:[#allocation5 + $0x90] sm:$0xff]
    %v198 = vld [vmem:[#allocation5 + $0x98] sm:$0xff]
    %v199 = vld [vmem:[#allocation5 + $0xa0] sm:$0xff]
    %v200 = vld [vmem:[#allocation5 + $0xa8] sm:$0xff]
    %v201 = vld [vmem:[#allocation5 + $0xb0] sm:$0xff]
    %v202 = vld [vmem:[#allocation5 + $0xb8] sm:$0xff]
    %v203 = vld [vmem:[#allocation5 + $0xc0] sm:$0xff]
    %v204 = vld [vmem:[#allocation5 + $0xc8] sm:$0xff]
    %v205 = vld [vmem:[#allocation5 + $0xd0] sm:$0xff]
    %v206 = vld [vmem:[#allocation5 + $0xd8] sm:$0xff]
    %v207 = vld [vmem:[#allocation5 + $0xe0] sm:$0xff]
    %v208 = vld [vmem:[#allocation5 + $0xe8] sm:$0xff]
    %v209 = vld [vmem:[#allocation5 + $0xf0] sm:$0xff]
    %v210 = vld [vmem:[#allocation5 + $0xf8] sm:$0xff]
    %v211 = vld [vmem:[%s5] sm:$0x1]
    %v213 = vlaneseq
    %v214 = vshrl.u32 %v213, 7
    %v215 = vsub.s32 0, %v214
    %v216 = vrot.slane %v178, %v215
    %218 = vmatprep.subr.mxu0 0.0
    %219 = vmatpush1.msra.mxu0 %v177
    %220 = vmatprep.subr.mxu0 0.0
    %221 = vmatpush1.msra.mxu0 %v176
    %222 = vmatprep.subr.mxu0 0.0
    %223 = vmatpush1.msra.mxu0 %v175
    %224 = vmatprep.subr.mxu0 0.0
    %225 = vmatpush1.msra.mxu0 %v174
    %226 = vmatprep.subr.mxu0 0.0
    %227 = vmatpush1.msra.mxu0 %v173
    %228 = vmatprep.subr.mxu0 0.0
    %229 = vmatpush1.msra.mxu0 %v172
    %230 = vmatprep.subr.mxu0 0.0
    %231 = vmatpush1.msra.mxu0 %v171
    %232 = vmatprep.subr.mxu0 0.0
    %233 = vmatpush1.msra.mxu0 %v170
    %234 = vmatprep.subr.mxu0 0.0
    %235 = vmatpush1.msra.mxu0 %v169
    %236 = vmatprep.subr.mxu0 0.0
    %237 = vmatpush1.msra.mxu0 %v168
    %238 = vmatprep.subr.mxu0 0.0
    %239 = vmatpush1.msra.mxu0 %v167
    %240 = vmatprep.subr.mxu0 0.0
    %241 = vmatpush1.msra.mxu0 %v166
    %242 = vmatprep.subr.mxu0 0.0
    %243 = vmatpush1.msra.mxu0 %v165
    %244 = vmatprep.subr.mxu0 0.0
    %245 = vmatpush1.msra.mxu0 %v164
    %246 = vmatprep.subr.mxu0 0.0
    %247 = vmatpush1.msra.mxu0 %v163
    %248 = vmatprep.subr.mxu0 0.0
    %249 = vmatpush1.msra.mxu0 %v162
    %250 = vmatprep.subr.mxu0 0.0
    %251 = vmatpush2.msra.mxu0 0.0
    %252 = vmatprep.subr.mxu0 0.0
    %253 = vmatpush2.msra.mxu0 0.0
    %254 = vmatprep.subr.mxu0 0.0
    %255 = vmatpush2.msra.mxu0 0.0
    %256 = vmatprep.subr.mxu0 0.0
    %257 = vmatpush2.msra.mxu0 0.0
    %258 = vmatprep.subr.mxu0 0.0
    %259 = vmatpush2.msra.mxu0 0.0
    %260 = vmatprep.subr.mxu0 0.0
    %261 = vmatpush2.msra.mxu0 0.0
    %262 = vmatprep.subr.mxu0 0.0
    %263 = vmatpush2.msra.mxu0 0.0
    %264 = vmatprep.subr.mxu0 0.0
    %265 = vmatpush2.msra.mxu0 0.0
    %266 = vmatprep.subr.mxu0 0.0
    %267 = vmatpush2.msra.mxu0 0.0
    %268 = vmatprep.subr.mxu0 0.0
    %269 = vmatpush2.msra.mxu0 0.0
    %270 = vmatprep.subr.mxu0 0.0
    %271 = vmatpush2.msra.mxu0 0.0
    %272 = vmatprep.subr.mxu0 0.0
    %273 = vmatpush2.msra.mxu0 0.0
    %274 = vmatprep.subr.mxu0 0.0
    %275 = vmatpush2.msra.mxu0 0.0
    %276 = vmatprep.subr.mxu0 0.0
    %277 = vmatpush2.msra.mxu0 0.0
    %278 = vmatprep.subr.mxu0 0.0
    %279 = vmatpush2.msra.mxu0 0.0
    %280 = vmatprep.subr.mxu0 0.0
    %281 = vmatpush2.msra.mxu0 0.0
    %282 = vmatprep.mubr.f32.mxu0 0.0
    %283 = vmatmul.mubr.f32.gmra.mxu0 %v161
    %v284 = vpop.f32.mrf.mxu0
    %v285 = vadd.f32 %v216, %v284
    %v286 = vpop.f32.mrf.mxu0
    %287 = vdwg.mxu0
    %v288 = vmax.f32 %v285, 0.0
    %v289 = vsel %vm148, 1, 0
    %v290 = vsel %vm149, 1, 0
    %v291 = vsel %vm150, 1, 0
    %v292 = vsel %vm151, 1, 0
    %v293 = vsel %vm152, 1, 0
    %v294 = vsel %vm153, 1, 0
    %v295 = vsel %vm154, 1, 0
    %v296 = vsel %vm155, 1, 0
    %vm297 = vcmp.eq.s32.totalorder %v289, 1
    %vm298 = vcmp.eq.s32.totalorder %v290, 1
    %vm299 = vcmp.eq.s32.totalorder %v291, 1
    %vm300 = vcmp.eq.s32.totalorder %v292, 1
    %vm301 = vcmp.eq.s32.totalorder %v293, 1
    %vm302 = vcmp.eq.s32.totalorder %v294, 1
    %vm303 = vcmp.eq.s32.totalorder %v295, 1
    %vm304 = vcmp.eq.s32.totalorder %v296, 1
    %v305 = vsel %vm297, %v288, -1e+30
    %v306 = vsel %vm298, %v288, -1e+30
    %v307 = vsel %vm299, %v288, -1e+30
    %v308 = vsel %vm300, %v288, -1e+30
    %v309 = vsel %vm301, %v288, -1e+30
    %v310 = vsel %vm302, %v288, -1e+30
    %v311 = vsel %vm303, %v288, -1e+30
    %v312 = vsel %vm304, %v288, -1e+30
    %v313 = vrot.slane %v305, 4
    %v314 = vmax.f32 %v305, %v313
    %v315 = vrot.slane %v314, 2
    %v316 = vmax.f32 %v314, %v315
    %v317 = vrot.slane %v316, 1
    %v318 = vmax.f32 %v316, %v317
    %v319 = vrot.slane %v306, 4
    %v320 = vmax.f32 %v306, %v319
    %v321 = vrot.slane %v320, 2
    %v322 = vmax.f32 %v320, %v321
    %v323 = vrot.slane %v322, 1
    %v324 = vmax.f32 %v322, %v323
    %v325 = vrot.slane %v307, 4
    %v326 = vmax.f32 %v307, %v325
    %v327 = vrot.slane %v326, 2
    %v328 = vmax.f32 %v326, %v327
    %v329 = vrot.slane %v328, 1
    %v330 = vmax.f32 %v328, %v329
    %v331 = vrot.slane %v308, 4
    %v332 = vmax.f32 %v308, %v331
    %v333 = vrot.slane %v332, 2
    %v334 = vmax.f32 %v332, %v333
    %v335 = vrot.slane %v334, 1
    %v336 = vmax.f32 %v334, %v335
    %v337 = vrot.slane %v309, 4
    %v338 = vmax.f32 %v309, %v337
    %v339 = vrot.slane %v338, 2
    %v340 = vmax.f32 %v338, %v339
    %v341 = vrot.slane %v340, 1
    %v342 = vmax.f32 %v340, %v341
    %v343 = vrot.slane %v310, 4
    %v344 = vmax.f32 %v310, %v343
    %v345 = vrot.slane %v344, 2
    %v346 = vmax.f32 %v344, %v345
    %v347 = vrot.slane %v346, 1
    %v348 = vmax.f32 %v346, %v347
    %v349 = vrot.slane %v311, 4
    %v350 = vmax.f32 %v311, %v349
    %v351 = vrot.slane %v350, 2
    %v352 = vmax.f32 %v350, %v351
    %v353 = vrot.slane %v352, 1
    %v354 = vmax.f32 %v352, %v353
    %v355 = vrot.slane %v312, 4
    %v356 = vmax.f32 %v312, %v355
    %v357 = vrot.slane %v356, 2
    %v358 = vmax.f32 %v356, %v357
    %v359 = vrot.slane %v358, 1
    %v360 = vmax.f32 %v358, %v359
    %v361 = vsel %vm160, 1, 0
    %vm362 = vcmp.eq.s32.totalorder %v361, 1
    %vm371 = vcmask 1041409
    %v372 = vsel %vm371, %v324, %v318
    %vm373 = vcmask 1042434
    %v374 = vsel %vm373, %v330, %v372
    %vm375 = vcmask 1043459
    %v376 = vsel %vm375, %v336, %v374
    %vm377 = vcmask 1044484
    %v378 = vsel %vm377, %v342, %v376
    %vm379 = vcmask 1045509
    %v380 = vsel %vm379, %v348, %v378
    %vm381 = vcmask 1046534
    %v382 = vsel %vm381, %v354, %v380
    %vm383 = vcmask 1047559
    %v384 = vsel %vm383, %v360, %v382
    %v386 = vsel %vm362, %v384, 0.0
    %v388 = vlaneseq
    %v389 = vshrl.u32 %v388, 7
    %v390 = vsub.s32 0, %v389
    %v391 = vrot.slane %v211, %v390
    %393 = vmatprep.subr.mxu0 0.0
    %394 = vmatpush1.msra.mxu0 %v194
    %395 = vmatprep.subr.mxu0 0.0
    %396 = vmatpush1.msra.mxu0 %v193
    %397 = vmatprep.subr.mxu0 0.0
    %398 = vmatpush1.msra.mxu0 %v192
    %399 = vmatprep.subr.mxu0 0.0
    %400 = vmatpush1.msra.mxu0 %v191
    %401 = vmatprep.subr.mxu0 0.0
    %402 = vmatpush1.msra.mxu0 %v190
    %403 = vmatprep.subr.mxu0 0.0
    %404 = vmatpush1.msra.mxu0 %v189
    %405 = vmatprep.subr.mxu0 0.0
    %406 = vmatpush1.msra.mxu0 %v188
    %407 = vmatprep.subr.mxu0 0.0
    %408 = vmatpush1.msra.mxu0 %v187
    %409 = vmatprep.subr.mxu0 0.0
    %410 = vmatpush1.msra.mxu0 %v186
    %411 = vmatprep.subr.mxu0 0.0
    %412 = vmatpush1.msra.mxu0 %v185
    %413 = vmatprep.subr.mxu0 0.0
    %414 = vmatpush1.msra.mxu0 %v184
    %415 = vmatprep.subr.mxu0 0.0
    %416 = vmatpush1.msra.mxu0 %v183
    %417 = vmatprep.subr.mxu0 0.0
    %418 = vmatpush1.msra.mxu0 %v182
    %419 = vmatprep.subr.mxu0 0.0
    %420 = vmatpush1.msra.mxu0 %v181
    %421 = vmatprep.subr.mxu0 0.0
    %422 = vmatpush1.msra.mxu0 %v180
    %423 = vmatprep.subr.mxu0 0.0
    %424 = vmatpush1.msra.mxu0 %v179
    %425 = vmatprep.subr.mxu0 0.0
    %426 = vmatpush2.msra.mxu0 %v210
    %427 = vmatprep.subr.mxu0 0.0
    %428 = vmatpush2.msra.mxu0 %v209
    %429 = vmatprep.subr.mxu0 0.0
    %430 = vmatpush2.msra.mxu0 %v208
    %431 = vmatprep.subr.mxu0 0.0
    %432 = vmatpush2.msra.mxu0 %v207
    %433 = vmatprep.subr.mxu0 0.0
    %434 = vmatpush2.msra.mxu0 %v206
    %435 = vmatprep.subr.mxu0 0.0
    %436 = vmatpush2.msra.mxu0 %v205
    %437 = vmatprep.subr.mxu0 0.0
    %438 = vmatpush2.msra.mxu0 %v204
    %439 = vmatprep.subr.mxu0 0.0
    %440 = vmatpush2.msra.mxu0 %v203
    %441 = vmatprep.subr.mxu0 0.0
    %442 = vmatpush2.msra.mxu0 %v202
    %443 = vmatprep.subr.mxu0 0.0
    %444 = vmatpush2.msra.mxu0 %v201
    %445 = vmatprep.subr.mxu0 0.0
    %446 = vmatpush2.msra.mxu0 %v200
    %447 = vmatprep.subr.mxu0 0.0
    %448 = vmatpush2.msra.mxu0 %v199
    %449 = vmatprep.subr.mxu0 0.0
    %450 = vmatpush2.msra.mxu0 %v198
    %451 = vmatprep.subr.mxu0 0.0
    %452 = vmatpush2.msra.mxu0 %v197
    %453 = vmatprep.subr.mxu0 0.0
    %454 = vmatpush2.msra.mxu0 %v196
    %455 = vmatprep.subr.mxu0 0.0
    %456 = vmatpush2.msra.mxu0 %v195
    %457 = vmatprep.mubr.f32.mxu0 %v161
    %458 = vmatmul.mubr.f32.gmra.mxu0 %v386
    %v459 = vpop.f32.mrf.mxu0
    %v460 = vadd.f32 %v391, %v459
    %v461 = vpop.f32.mrf.mxu0
    %462 = vdwg.mxu0
    %v463 = vmax.f32 %v460, 0.0
    %v464 = vld [vmem:[#allocation7] sm:$0xff]
    %v465 = vld [vmem:[#allocation7 + $0x8] sm:$0xff]
    %v466 = vld [vmem:[#allocation7 + $0x10] sm:$0xff]
    %v467 = vld [vmem:[#allocation7 + $0x18] sm:$0xff]
    %v468 = vld [vmem:[#allocation7 + $0x20] sm:$0xff]
    %v469 = vld [vmem:[#allocation7 + $0x28] sm:$0xff]
    %v470 = vld [vmem:[#allocation7 + $0x30] sm:$0xff]
    %v471 = vld [vmem:[#allocation7 + $0x38] sm:$0xff]
    %v472 = vld [vmem:[#allocation7 + $0x40] sm:$0xff]
    %v473 = vld [vmem:[#allocation7 + $0x48] sm:$0xff]
    %v474 = vld [vmem:[#allocation7 + $0x50] sm:$0xff]
    %v475 = vld [vmem:[#allocation7 + $0x58] sm:$0xff]
    %v476 = vld [vmem:[#allocation7 + $0x60] sm:$0xff]
    %v477 = vld [vmem:[#allocation7 + $0x68] sm:$0xff]
    %v478 = vld [vmem:[#allocation7 + $0x70] sm:$0xff]
    %v479 = vld [vmem:[#allocation7 + $0x78] sm:$0xff]
    %v480 = vld [vmem:[%s7] sm:$0x1]
    %v481 = vld [vmem:[#allocation8] sm:$0xff]
    %v482 = vld [vmem:[#allocation8 + $0x8] sm:$0xff]
    %v483 = vld [vmem:[#allocation8 + $0x10] sm:$0xff]
    %v484 = vld [vmem:[#allocation8 + $0x18] sm:$0xff]
    %v485 = vld [vmem:[#allocation8 + $0x20] sm:$0xff]
    %v486 = vld [vmem:[#allocation8 + $0x28] sm:$0xff]
    %v487 = vld [vmem:[#allocation8 + $0x30] sm:$0xff]
    %v488 = vld [vmem:[#allocation8 + $0x38] sm:$0xff]
    %v489 = vld [vmem:[#allocation8 + $0x40] sm:$0xff]
    %v490 = vld [vmem:[#allocation8 + $0x48] sm:$0xff]
    %v491 = vld [vmem:[#allocation8 + $0x50] sm:$0xff]
    %v492 = vld [vmem:[#allocation8 + $0x58] sm:$0xff]
    %v493 = vld [vmem:[#allocation8 + $0x60] sm:$0xff]
    %v494 = vld [vmem:[#allocation8 + $0x68] sm:$0xff]
    %v495 = vld [vmem:[#allocation8 + $0x70] sm:$0xff]
    %v496 = vld [vmem:[#allocation8 + $0x78] sm:$0xff]
    %v497 = vld [vmem:[#allocation8 + $0x80] sm:$0xff]
    %v498 = vld [vmem:[#allocation8 + $0x88] sm:$0xff]
    %v499 = vld [vmem:[#allocation8 + $0x90] sm:$0xff]
    %v500 = vld [vmem:[#allocation8 + $0x98] sm:$0xff]
    %v501 = vld [vmem:[#allocation8 + $0xa0] sm:$0xff]
    %v502 = vld [vmem:[#allocation8 + $0xa8] sm:$0xff]
    %v503 = vld [vmem:[#allocation8 + $0xb0] sm:$0xff]
    %v504 = vld [vmem:[#allocation8 + $0xb8] sm:$0xff]
    %v505 = vld [vmem:[#allocation8 + $0xc0] sm:$0xff]
    %v506 = vld [vmem:[#allocation8 + $0xc8] sm:$0xff]
    %v507 = vld [vmem:[#allocation8 + $0xd0] sm:$0xff]
    %v508 = vld [vmem:[#allocation8 + $0xd8] sm:$0xff]
    %v509 = vld [vmem:[#allocation8 + $0xe0] sm:$0xff]
    %v510 = vld [vmem:[#allocation8 + $0xe8] sm:$0xff]
    %v511 = vld [vmem:[#allocation8 + $0xf0] sm:$0xff]
    %v512 = vld [vmem:[#allocation8 + $0xf8] sm:$0xff]
    %v513 = vld [vmem:[%s9] sm:$0x1]
    %v515 = vlaneseq
    %v516 = vshrl.u32 %v515, 7
    %v517 = vsub.s32 0, %v516
    %v518 = vrot.slane %v480, %v517
    %520 = vmatprep.subr.mxu0 0.0
    %521 = vmatpush1.msra.mxu0 %v479
    %522 = vmatprep.subr.mxu0 0.0
    %523 = vmatpush1.msra.mxu0 %v478
    %524 = vmatprep.subr.mxu0 0.0
    %525 = vmatpush1.msra.mxu0 %v477
    %526 = vmatprep.subr.mxu0 0.0
    %527 = vmatpush1.msra.mxu0 %v476
    %528 = vmatprep.subr.mxu0 0.0
    %529 = vmatpush1.msra.mxu0 %v475
    %530 = vmatprep.subr.mxu0 0.0
    %531 = vmatpush1.msra.mxu0 %v474
    %532 = vmatprep.subr.mxu0 0.0
    %533 = vmatpush1.msra.mxu0 %v473
    %534 = vmatprep.subr.mxu0 0.0
    %535 = vmatpush1.msra.mxu0 %v472
    %536 = vmatprep.subr.mxu0 0.0
    %537 = vmatpush1.msra.mxu0 %v471
    %538 = vmatprep.subr.mxu0 0.0
    %539 = vmatpush1.msra.mxu0 %v470
    %540 = vmatprep.subr.mxu0 0.0
    %541 = vmatpush1.msra.mxu0 %v469
    %542 = vmatprep.subr.mxu0 0.0
    %543 = vmatpush1.msra.mxu0 %v468
    %544 = vmatprep.subr.mxu0 0.0
    %545 = vmatpush1.msra.mxu0 %v467
    %546 = vmatprep.subr.mxu0 0.0
    %547 = vmatpush1.msra.mxu0 %v466
    %548 = vmatprep.subr.mxu0 0.0
    %549 = vmatpush1.msra.mxu0 %v465
    %550 = vmatprep.subr.mxu0 0.0
    %551 = vmatpush1.msra.mxu0 %v464
    %552 = vmatprep.subr.mxu0 0.0
    %553 = vmatpush2.msra.mxu0 0.0
    %554 = vmatprep.subr.mxu0 0.0
    %555 = vmatpush2.msra.mxu0 0.0
    %556 = vmatprep.subr.mxu0 0.0
    %557 = vmatpush2.msra.mxu0 0.0
    %558 = vmatprep.subr.mxu0 0.0
    %559 = vmatpush2.msra.mxu0 0.0
    %560 = vmatprep.subr.mxu0 0.0
    %561 = vmatpush2.msra.mxu0 0.0
    %562 = vmatprep.subr.mxu0 0.0
    %563 = vmatpush2.msra.mxu0 0.0
    %564 = vmatprep.subr.mxu0 0.0
    %565 = vmatpush2.msra.mxu0 0.0
    %566 = vmatprep.subr.mxu0 0.0
    %567 = vmatpush2.msra.mxu0 0.0
    %568 = vmatprep.subr.mxu0 0.0
    %569 = vmatpush2.msra.mxu0 0.0
    %570 = vmatprep.subr.mxu0 0.0
    %571 = vmatpush2.msra.mxu0 0.0
    %572 = vmatprep.subr.mxu0 0.0
    %573 = vmatpush2.msra.mxu0 0.0
    %574 = vmatprep.subr.mxu0 0.0
    %575 = vmatpush2.msra.mxu0 0.0
    %576 = vmatprep.subr.mxu0 0.0
    %577 = vmatpush2.msra.mxu0 0.0
    %578 = vmatprep.subr.mxu0 0.0
    %579 = vmatpush2.msra.mxu0 0.0
    %580 = vmatprep.subr.mxu0 0.0
    %581 = vmatpush2.msra.mxu0 0.0
    %582 = vmatprep.subr.mxu0 0.0
    %583 = vmatpush2.msra.mxu0 0.0
    %584 = vmatprep.mubr.f32.mxu0 0.0
    %585 = vmatmul.mubr.f32.gmra.mxu0 %v463
    %v586 = vpop.f32.mrf.mxu0
    %v587 = vadd.f32 %v518, %v586
    %v588 = vpop.f32.mrf.mxu0
    %589 = vdwg.mxu0
    %v590 = vmax.f32 %v587, 0.0
    %v591 = vsel %vm297, %v590, -1e+30
    %v592 = vsel %vm298, %v590, -1e+30
    %v593 = vsel %vm299, %v590, -1e+30
    %v594 = vsel %vm300, %v590, -1e+30
    %v595 = vsel %vm301, %v590, -1e+30
    %v596 = vsel %vm302, %v590, -1e+30
    %v597 = vsel %vm303, %v590, -1e+30
    %v598 = vsel %vm304, %v590, -1e+30
    %v599 = vrot.slane %v591, 4
    %v600 = vmax.f32 %v591, %v599
    %v601 = vrot.slane %v600, 2
    %v602 = vmax.f32 %v600, %v601
    %v603 = vrot.slane %v602, 1
    %v604 = vmax.f32 %v602, %v603
    %v605 = vrot.slane %v592, 4
    %v606 = vmax.f32 %v592, %v605
    %v607 = vrot.slane %v606, 2
    %v608 = vmax.f32 %v606, %v607
    %v609 = vrot.slane %v608, 1
    %v610 = vmax.f32 %v608, %v609
    %v611 = vrot.slane %v593, 4
    %v612 = vmax.f32 %v593, %v611
    %v613 = vrot.slane %v612, 2
    %v614 = vmax.f32 %v612, %v613
    %v615 = vrot.slane %v614, 1
    %v616 = vmax.f32 %v614, %v615
    %v617 = vrot.slane %v594, 4
    %v618 = vmax.f32 %v594, %v617
    %v619 = vrot.slane %v618, 2
    %v620 = vmax.f32 %v618, %v619
    %v621 = vrot.slane %v620, 1
    %v622 = vmax.f32 %v620, %v621
    %v623 = vrot.slane %v595, 4
    %v624 = vmax.f32 %v595, %v623
    %v625 = vrot.slane %v624, 2
    %v626 = vmax.f32 %v624, %v625
    %v627 = vrot.slane %v626, 1
    %v628 = vmax.f32 %v626, %v627
    %v629 = vrot.slane %v596, 4
    %v630 = vmax.f32 %v596, %v629
    %v631 = vrot.slane %v630, 2
    %v632 = vmax.f32 %v630, %v631
    %v633 = vrot.slane %v632, 1
    %v634 = vmax.f32 %v632, %v633
    %v635 = vrot.slane %v597, 4
    %v636 = vmax.f32 %v597, %v635
    %v637 = vrot.slane %v636, 2
    %v638 = vmax.f32 %v636, %v637
    %v639 = vrot.slane %v638, 1
    %v640 = vmax.f32 %v638, %v639
    %v641 = vrot.slane %v598, 4
    %v642 = vmax.f32 %v598, %v641
    %v643 = vrot.slane %v642, 2
    %v644 = vmax.f32 %v642, %v643
    %v645 = vrot.slane %v644, 1
    %v646 = vmax.f32 %v644, %v645
    %v655 = vsel %vm371, %v610, %v604
    %v656 = vsel %vm373, %v616, %v655
    %v657 = vsel %vm375, %v622, %v656
    %v658 = vsel %vm377, %v628, %v657
    %v659 = vsel %vm379, %v634, %v658
    %v660 = vsel %vm381, %v640, %v659
    %v661 = vsel %vm383, %v646, %v660
    %v663 = vsel %vm362, %v661, 0.0
    %v665 = vlaneseq
    %v666 = vshrl.u32 %v665, 7
    %v667 = vsub.s32 0, %v666
    %v668 = vrot.slane %v513, %v667
    %670 = vmatprep.subr.mxu0 0.0
    %671 = vmatpush1.msra.mxu0 %v496
    %672 = vmatprep.subr.mxu0 0.0
    %673 = vmatpush1.msra.mxu0 %v495
    %674 = vmatprep.subr.mxu0 0.0
    %675 = vmatpush1.msra.mxu0 %v494
    %676 = vmatprep.subr.mxu0 0.0
    %677 = vmatpush1.msra.mxu0 %v493
    %678 = vmatprep.subr.mxu0 0.0
    %679 = vmatpush1.msra.mxu0 %v492
    %680 = vmatprep.subr.mxu0 0.0
    %681 = vmatpush1.msra.mxu0 %v491
    %682 = vmatprep.subr.mxu0 0.0
    %683 = vmatpush1.msra.mxu0 %v490
    %684 = vmatprep.subr.mxu0 0.0
    %685 = vmatpush1.msra.mxu0 %v489
    %686 = vmatprep.subr.mxu0 0.0
    %687 = vmatpush1.msra.mxu0 %v488
    %688 = vmatprep.subr.mxu0 0.0
    %689 = vmatpush1.msra.mxu0 %v487
    %690 = vmatprep.subr.mxu0 0.0
    %691 = vmatpush1.msra.mxu0 %v486
    %692 = vmatprep.subr.mxu0 0.0
    %693 = vmatpush1.msra.mxu0 %v485
    %694 = vmatprep.subr.mxu0 0.0
    %695 = vmatpush1.msra.mxu0 %v484
    %696 = vmatprep.subr.mxu0 0.0
    %697 = vmatpush1.msra.mxu0 %v483
    %698 = vmatprep.subr.mxu0 0.0
    %699 = vmatpush1.msra.mxu0 %v482
    %700 = vmatprep.subr.mxu0 0.0
    %701 = vmatpush1.msra.mxu0 %v481
    %702 = vmatprep.subr.mxu0 0.0
    %703 = vmatpush2.msra.mxu0 %v512
    %704 = vmatprep.subr.mxu0 0.0
    %705 = vmatpush2.msra.mxu0 %v511
    %706 = vmatprep.subr.mxu0 0.0
    %707 = vmatpush2.msra.mxu0 %v510
    %708 = vmatprep.subr.mxu0 0.0
    %709 = vmatpush2.msra.mxu0 %v509
    %710 = vmatprep.subr.mxu0 0.0
    %711 = vmatpush2.msra.mxu0 %v508
    %712 = vmatprep.subr.mxu0 0.0
    %713 = vmatpush2.msra.mxu0 %v507
    %714 = vmatprep.subr.mxu0 0.0
    %715 = vmatpush2.msra.mxu0 %v506
    %716 = vmatprep.subr.mxu0 0.0
    %717 = vmatpush2.msra.mxu0 %v505
    %718 = vmatprep.subr.mxu0 0.0
    %719 = vmatpush2.msra.mxu0 %v504
    %720 = vmatprep.subr.mxu0 0.0
    %721 = vmatpush2.msra.mxu0 %v503
    %722 = vmatprep.subr.mxu0 0.0
    %723 = vmatpush2.msra.mxu0 %v502
    %724 = vmatprep.subr.mxu0 0.0
    %725 = vmatpush2.msra.mxu0 %v501
    %726 = vmatprep.subr.mxu0 0.0
    %727 = vmatpush2.msra.mxu0 %v500
    %728 = vmatprep.subr.mxu0 0.0
    %729 = vmatpush2.msra.mxu0 %v499
    %730 = vmatprep.subr.mxu0 0.0
    %731 = vmatpush2.msra.mxu0 %v498
    %732 = vmatprep.subr.mxu0 0.0
    %733 = vmatpush2.msra.mxu0 %v497
    %734 = vmatprep.mubr.f32.mxu0 %v463
    %735 = vmatmul.mubr.f32.gmra.mxu0 %v663
    %v736 = vpop.f32.mrf.mxu0
    %v737 = vadd.f32 %v668, %v736
    %v738 = vpop.f32.mrf.mxu0
    %739 = vdwg.mxu0
    %v740 = vmax.f32 %v737, 0.0
    %741 = vst [vmem:[#allocation10] sm:$0xff] %v740
    // Predicated region
    $region58: #{graph_model.1} parent=1 // pred_check
      _
    $region59: #{graph_model.1} parent=1 // pred_check_branch
      %743 = sbr.rel (0) target = $region61
    $region60: #{graph_model.1} parent=1 // pred_region
      %s745 = ssub.s32 128, 128
      %746 = vsyncadd [#allocation4], %s745
      %s748 = sshll.u32 [#allocation10], 4
      %s749 = int_to_ptr.vmem [resolvable:$true] %s748
      %751 = dma.vmem_to_hbm [thread:$0]  %s749, 128, %s10, [#allocation4]
    $region61: #{graph_model.1} parent=1 // pred_fallthru
      _
    // Predicated region
    $region62: #{graph_model.1} parent=1 // pred_check
      _
    $region63: #{graph_model.1} parent=1 // pred_check_branch
      %753 = sbr.rel (0) target = $region65
    $region64: #{graph_model.1} parent=1 // pred_region
      %754 = dma.done [#allocation4], 128
    $region65: #{graph_model.1} parent=1 // pred_fallthru
      _
    %755 = vsyncpa [#allocation3], 1
    %756 = vsyncpa [#allocation6], 1
    %757 = vsyncpa [#allocation9], 1
    %758 = vsyncpa [#allocation4], 1

</llo_original>
